<compile_context>
chip_gen: v6e
topology: v6e:2x2x1
jax: 0.10.0
libtpu: 0.0.40
codegen_flags: <defaults>
</compile_context>

<pallas_src>
import jax
import jax.numpy as jnp
import numpy as np
from jax.experimental import pallas as pl
from jax.experimental.pallas import tpu as pltpu

M_IN = -23.0
M_OUT = -5.0
OOD_WEIGHT = 0.1


def _round_up(v, m):
    return (v + m - 1) // m * m


def _pick_tk(d_pad):
    # Largest K tile that divides the padded feature dim (d_pad is a multiple of 128,
    # so any candidate that divides it is also <= d_pad).
    for cand in (2048, 1024, 512, 256, 128):
        if d_pad % cand == 0:
            return cand
    return 128


def _mlp_logits_kernel(x_ref, w1_ref, b1_ref, w2_ref, b2_ref, logits_ref, acc_ref):
    """Fused Linear(D->H) + ReLU + Linear(H->C). Grid = (batch tiles, K tiles)."""
    k = pl.program_id(1)

    @pl.when(k == 0)
    def _():
        acc_ref[...] = jnp.zeros_like(acc_ref)

    # Hot path: bf16 x bf16 -> f32 accumulate on the MXU (K-tiled).
    acc_ref[...] += jnp.dot(x_ref[...], w1_ref[...],
                            preferred_element_type=jnp.float32)

    @pl.when(k == pl.num_programs(1) - 1)
    def _():
        emb = jnp.maximum(acc_ref[...] + b1_ref[...], 0.0)          # bias + ReLU (VPU)
        logits_ref[...] = (
            jnp.dot(emb, w2_ref[...], preferred_element_type=jnp.float32)
            + b2_ref[...]
        )


def energy_trainer_forward(x, y, x_aux, params):
    """Reproduces EnergyTrainer.forward(x, y, x_aux) -> (loss, info_dict)."""
    w1, b1, w2, b2 = params
    b_in, b_out = x.shape[0], x_aux.shape[0]
    d_in = int(np.prod(x.shape[1:]))
    hidden = w1.shape[1]
    num_classes = w2.shape[1]

    # ---- tiling choices (sized against the 32 MiB scoped VMEM budget) ----
    lane = 128
    d_pad = _round_up(d_in, lane)
    tk = _pick_tk(d_pad)
    # 16-row sublane minimum so bf16 batch tiles stay tile-aligned.
    tb = 128 if max(b_in, b_out) >= 128 else 16
    b_in_pad = _round_up(b_in, tb)     # pad so the in/out split lands on a tile boundary
    b_out_pad = _round_up(b_out, tb)
    b_pad = b_in_pad + b_out_pad
    h_pad = _round_up(hidden, lane)
    c_pad = _round_up(num_classes, lane)

    # ---- glue: flatten NCHW -> (batch, D), pad to tile multiples, bf16 hot inputs ----
    x_flat = x.reshape(b_in, -1)
    xa_flat = x_aux.reshape(b_out, -1)
    # TODO(synk): at production scale feed x / x_aux as two separate HBM inputs with
    # clamped index_maps instead of materializing this padded, concatenated slab.
    xs = jnp.zeros((b_pad, d_pad), dtype=jnp.bfloat16)
    xs = xs.at[:b_in, :d_in].set(x_flat.astype(jnp.bfloat16))
    xs = xs.at[b_in_pad:b_in_pad + b_out, :d_in].set(xa_flat.astype(jnp.bfloat16))

    w1p = jnp.zeros((d_pad, h_pad), dtype=jnp.bfloat16)
    w1p = w1p.at[:d_in, :hidden].set(w1.astype(jnp.bfloat16))
    b1p = jnp.zeros((1, h_pad), dtype=jnp.float32).at[0, :hidden].set(
        b1.astype(jnp.float32))
    w2p = jnp.zeros((h_pad, c_pad), dtype=jnp.float32).at[:hidden, :num_classes].set(
        w2.astype(jnp.float32))
    b2p = jnp.zeros((1, c_pad), dtype=jnp.float32).at[0, :num_classes].set(
        b2.astype(jnp.float32))

    grid = (b_pad // tb, d_pad // tk)
    flops = 2 * b_pad * d_pad * h_pad + 2 * b_pad * h_pad * c_pad
    bytes_accessed = (b_pad * d_pad * 2 + d_pad * h_pad * 2
                      + h_pad * c_pad * 4 + b_pad * c_pad * 4
                      + h_pad * 4 + c_pad * 4)

    logits_pad = pl.pallas_call(
        _mlp_logits_kernel,
        out_shape=jax.ShapeDtypeStruct((b_pad, c_pad), jnp.float32),
        grid_spec=pltpu.PrefetchScalarGridSpec(
            num_scalar_prefetch=0,
            grid=grid,
            in_specs=[
                pl.BlockSpec((tb, tk), lambda i, k: (i, k)),        # xs
                pl.BlockSpec((tk, h_pad), lambda i, k: (k, 0)),     # w1
                pl.BlockSpec((1, h_pad), lambda i, k: (0, 0)),      # b1
                pl.BlockSpec((h_pad, c_pad), lambda i, k: (0, 0)),  # w2
                pl.BlockSpec((1, c_pad), lambda i, k: (0, 0)),      # b2
            ],
            out_specs=pl.BlockSpec((tb, c_pad), lambda i, k: (i, 0)),
            scratch_shapes=[pltpu.VMEM((tb, h_pad), jnp.float32)],
        ),
        compiler_params=pltpu.CompilerParams(
            dimension_semantics=("parallel", "arbitrary"),
            vmem_limit_bytes=32 * 1024 * 1024,
        ),
        cost_estimate=pl.CostEstimate(
            flops=flops, transcendentals=0, bytes_accessed=bytes_accessed),
    )(xs, w1p, b1p, w2p, b2p)

    # ---- O(batch * classes) tail in XLA: slice off padded rows/lanes, derive losses ----
    logits_in = logits_pad[:b_in, :num_classes]
    logits_out = logits_pad[b_in_pad:b_in_pad + b_out, :num_classes]

    lse_in = jax.nn.logsumexp(logits_in, axis=-1)
    lse_out = jax.nn.logsumexp(logits_out, axis=-1)

    # CrossEntropyLoss (mean reduction)
    true_logit = jnp.take_along_axis(
        logits_in, y[:, None].astype(jnp.int32), axis=-1)[:, 0]
    in_loss = jnp.mean(lse_in - true_logit)

    pred = jnp.argmax(logits_in, axis=-1)
    acc = jnp.mean((pred == y).astype(jnp.float32))

    # EnergyTrainer.ood_loss
    in_energy = -lse_in
    out_energy = -lse_out
    in_losses = jnp.maximum(0.0, in_energy - M_IN) ** 2
    out_losses = jnp.maximum(0.0, M_OUT - out_energy) ** 2
    ood_loss = jnp.mean(in_losses) + jnp.mean(out_losses)

    loss = in_loss + OOD_WEIGHT * ood_loss

    info_dict = {
        'classifier/acc': acc,
        'classifier/in_loss': in_loss,
        'classifier/in_logits': logits_in,
        'general/loss': loss,
        'out/ood_loss': ood_loss,
        'energies/in_energy': in_energy,
        'energies/out_energy': out_energy,
        'energies/in_losses': in_losses,
        'energies/out_losses': out_losses,
    }
    return loss, info_dict


def _reference_forward(x, y, x_aux, params):
    """Pure-JAX reference of the same forward pass (same bf16 matmul dtypes)."""
    w1, b1, w2, b2 = params
    b_in = x.shape[0]
    xs = jnp.concatenate([x, x_aux], axis=0)
    xs = xs.reshape(xs.shape[0], -1)
    emb = jnp.maximum(
        jnp.dot(xs.astype(jnp.bfloat16), w1.astype(jnp.bfloat16),
                preferred_element_type=jnp.float32) + b1, 0.0)
    logits = jnp.dot(emb, w2.astype(jnp.float32),
                     preferred_element_type=jnp.float32) + b2
    logits_in, logits_out = logits[:b_in], logits[b_in:]
    lse_in = jax.nn.logsumexp(logits_in, axis=-1)
    lse_out = jax.nn.logsumexp(logits_out, axis=-1)
    in_loss = jnp.mean(lse_in - logits_in[jnp.arange(b_in), y])
    in_energy, out_energy = -lse_in, -lse_out
    in_losses = jnp.maximum(0.0, in_energy - M_IN) ** 2
    out_losses = jnp.maximum(0.0, M_OUT - out_energy) ** 2
    ood = jnp.mean(in_losses) + jnp.mean(out_losses)
    return in_loss + OOD_WEIGHT * ood, logits_in


if __name__ == "__main__":
    # small shapes consistent with the forward: NCHW images + int labels
    B_IN, B_OOD, C, H, W = 2, 2, 4, 16, 16
    HIDDEN, NUM_CLASSES = 32, 10
    D = C * H * W

    key = jax.random.PRNGKey(0)
    kx, kaux, ky, kw1, kw2 = jax.random.split(key, 5)

    x = jax.random.normal(kx, (B_IN, C, H, W), dtype=jnp.float32)
    x_aux = jax.random.normal(kaux, (B_OOD, C, H, W), dtype=jnp.float32)
    y = jax.random.randint(ky, (B_IN,), 0, NUM_CLASSES, dtype=jnp.int32)

    # deterministic synthetic parameters (no checkpoint loading)
    w1 = 0.02 * jax.random.normal(kw1, (D, HIDDEN), dtype=jnp.float32)
    b1 = jnp.zeros((HIDDEN,), dtype=jnp.float32)
    w2 = 0.1 * jax.random.normal(kw2, (HIDDEN, NUM_CLASSES), dtype=jnp.float32)
    b2 = jnp.zeros((NUM_CLASSES,), dtype=jnp.float32)
    params = (w1, b1, w2, b2)

    fwd = jax.jit(energy_trainer_forward)
    loss, info = fwd(x, y, x_aux, params)
    jax.block_until_ready((loss, info))

    ref_loss, ref_logits_in = _reference_forward(x, y, x_aux, params)
    np.testing.assert_allclose(np.asarray(loss), np.asarray(ref_loss),
                               rtol=1e-3, atol=1e-3)
    np.testing.assert_allclose(np.asarray(info['classifier/in_logits']),
                               np.asarray(ref_logits_in), rtol=1e-3, atol=1e-3)

    print("KERNEL_OK")
</pallas_src>

<mosaic_0001>
module attributes {stable_mosaic.version = 11 : i64} {
  func.func @_mlp_logits_kernel(%arg0: i32, %arg1: i32, %arg2: memref<16x1024xbf16, #tpu.memory_space<vmem>>, %arg3: memref<1024x128xbf16, #tpu.memory_space<vmem>>, %arg4: memref<1x128xf32, #tpu.memory_space<vmem>>, %arg5: memref<128x128xf32, #tpu.memory_space<vmem>>, %arg6: memref<1x128xf32, #tpu.memory_space<vmem>>, %arg7: memref<16x128xf32, #tpu.memory_space<vmem>>, %arg8: memref<16x128xf32, #tpu.memory_space<vmem>>) attributes {dimension_semantics = [#tpu.dimension_semantics<parallel>, #tpu.dimension_semantics<arbitrary>], iteration_bounds = array<i64: 2, 1>, scalar_prefetch = 0 : i64, scratch_operands = 1 : i64, tpu.core_type = #tpu.core_type<tc>, window_params = [{transform_indices = @transform_0, window_bounds = array<i64: 16, 1024>}, {transform_indices = @transform_1, window_bounds = array<i64: 1024, 128>}, {pipeline_mode = #tpu.pipeline_mode<synchronous>, transform_indices = @transform_2, window_bounds = array<i64: 1, 128>}, {pipeline_mode = #tpu.pipeline_mode<synchronous>, transform_indices = @transform_3, window_bounds = array<i64: 128, 128>}, {pipeline_mode = #tpu.pipeline_mode<synchronous>, transform_indices = @transform_4, window_bounds = array<i64: 1, 128>}, {transform_indices = @transform_5, window_bounds = array<i64: 16, 128>}]} {
    %c0_i32 = arith.constant 0 : i32
    %0 = arith.cmpi eq, %arg1, %c0_i32 : i32
    %1 = arith.extui %0 : i1 to i32
    %c0_i32_0 = arith.constant 0 : i32
    %2 = arith.cmpi ne, %1, %c0_i32_0 : i32
    scf.if %2 {
      %cst_10 = arith.constant 0.000000e+00 : f32
      %12 = vector.broadcast %cst_10 : f32 to vector<16x128xf32>
      %c0_11 = arith.constant 0 : index
      %c0_12 = arith.constant 0 : index
      %13 = vector.load %arg8[%c0_11, %c0_12] : memref<16x128xf32, #tpu.memory_space<vmem>>, vector<16x128xf32>
      tpu.vector_store %arg8[%c0_11, %c0_12], %12 {strides = array<i32>} : memref<16x128xf32, #tpu.memory_space<vmem>>, vector<16x128xf32>,
    } else {
    }
    %c0 = arith.constant 0 : index
    %c0_1 = arith.constant 0 : index
    %3 = vector.load %arg8[%c0, %c0_1] : memref<16x128xf32, #tpu.memory_space<vmem>>, vector<16x128xf32>
    %c0_2 = arith.constant 0 : index
    %c0_3 = arith.constant 0 : index
    %4 = vector.load %arg2[%c0_2, %c0_3] : memref<16x1024xbf16, #tpu.memory_space<vmem>>, vector<16x1024xbf16>
    %c0_4 = arith.constant 0 : index
    %c0_5 = arith.constant 0 : index
    %5 = vector.load %arg3[%c0_4, %c0_5] : memref<1024x128xbf16, #tpu.memory_space<vmem>>, vector<1024x128xbf16>
    %cst = arith.constant dense<0.000000e+00> : vector<16x128xf32>
    %6 = tpu.matmul %4, %5, %cst {dimension_numbers = #tpu.dot_dimension_numbers<[1], [0], [0], [1], [0, 0, 1, 1], [], []>} : vector<16x1024xbf16>, vector<1024x128xbf16>, vector<16x128xf32> -> vector<16x128xf32>
    %7 = arith.addf %3, %6 : vector<16x128xf32>
    %c0_6 = arith.constant 0 : index
    %c0_7 = arith.constant 0 : index
    %8 = vector.load %arg8[%c0_6, %c0_7] : memref<16x128xf32, #tpu.memory_space<vmem>>, vector<16x128xf32>
    tpu.vector_store %arg8[%c0_6, %c0_7], %7 {strides = array<i32>} : memref<16x128xf32, #tpu.memory_space<vmem>>, vector<16x128xf32>,
    %c0_i32_8 = arith.constant 0 : i32
    %9 = arith.cmpi eq, %arg1, %c0_i32_8 : i32
    %10 = arith.extui %9 : i1 to i32
    %c0_i32_9 = arith.constant 0 : i32
    %11 = arith.cmpi ne, %10, %c0_i32_9 : i32
    scf.if %11 {
      %c0_10 = arith.constant 0 : index
      %c0_11 = arith.constant 0 : index
      %12 = vector.load %arg8[%c0_10, %c0_11] : memref<16x128xf32, #tpu.memory_space<vmem>>, vector<16x128xf32>
      %c0_12 = arith.constant 0 : index
      %c0_13 = arith.constant 0 : index
      %13 = vector.load %arg4[%c0_12, %c0_13] : memref<1x128xf32, #tpu.memory_space<vmem>>, vector<1x128xf32>
      %14 = vector.broadcast %13 : vector<1x128xf32> to vector<16x128xf32>
      %15 = arith.addf %12, %14 : vector<16x128xf32>
      %cst_14 = arith.constant 0.000000e+00 : f32
      %16 = vector.broadcast %cst_14 : f32 to vector<16x128xf32>
      %17 = arith.maximumf %15, %16 : vector<16x128xf32>
      %c0_15 = arith.constant 0 : index
      %c0_16 = arith.constant 0 : index
      %18 = vector.load %arg5[%c0_15, %c0_16] : memref<128x128xf32, #tpu.memory_space<vmem>>, vector<128x128xf32>
      %cst_17 = arith.constant dense<0.000000e+00> : vector<16x128xf32>
      %19 = tpu.matmul %17, %18, %cst_17 {dimension_numbers = #tpu.dot_dimension_numbers<[1], [0], [0], [1], [0, 0, 1, 1], [], []>} : vector<16x128xf32>, vector<128x128xf32>, vector<16x128xf32> -> vector<16x128xf32>
      %c0_18 = arith.constant 0 : index
      %c0_19 = arith.constant 0 : index
      %20 = vector.load %arg6[%c0_18, %c0_19] : memref<1x128xf32, #tpu.memory_space<vmem>>, vector<1x128xf32>
      %21 = vector.broadcast %20 : vector<1x128xf32> to vector<16x128xf32>
      %22 = arith.addf %19, %21 : vector<16x128xf32>
      %c0_20 = arith.constant 0 : index
      %c0_21 = arith.constant 0 : index
      %23 = vector.load %arg7[%c0_20, %c0_21] : memref<16x128xf32, #tpu.memory_space<vmem>>, vector<16x128xf32>
      tpu.vector_store %arg7[%c0_20, %c0_21], %22 {strides = array<i32>} : memref<16x128xf32, #tpu.memory_space<vmem>>, vector<16x128xf32>,
    } else {
    }
    return
  }
  func.func @transform_0(%arg0: i32, %arg1: i32) -> (i32, i32) {
    %c0_i32 = arith.constant 0 : i32
    return %arg0, %arg1 : i32, i32
  }
  func.func @transform_1(%arg0: i32, %arg1: i32) -> (i32, i32) {
    %c0_i32 = arith.constant 0 : i32
    %c0_i32_0 = arith.constant 0 : i32
    return %arg1, %c0_i32 : i32, i32
  }
  func.func @transform_2(%arg0: i32, %arg1: i32) -> (i32, i32) {
    %c0_i32 = arith.constant 0 : i32
    %c0_i32_0 = arith.constant 0 : i32
    %c0_i32_1 = arith.constant 0 : i32
    return %c0_i32, %c0_i32_0 : i32, i32
  }
  func.func @transform_3(%arg0: i32, %arg1: i32) -> (i32, i32) {
    %c0_i32 = arith.constant 0 : i32
    %c0_i32_0 = arith.constant 0 : i32
    %c0_i32_1 = arith.constant 0 : i32
    return %c0_i32, %c0_i32_0 : i32, i32
  }
  func.func @transform_4(%arg0: i32, %arg1: i32) -> (i32, i32) {
    %c0_i32 = arith.constant 0 : i32
    %c0_i32_0 = arith.constant 0 : i32
    %c0_i32_1 = arith.constant 0 : i32
    return %c0_i32, %c0_i32_0 : i32, i32
  }
  func.func @transform_5(%arg0: i32, %arg1: i32) -> (i32, i32) {
    %c0_i32 = arith.constant 0 : i32
    %c0_i32_0 = arith.constant 0 : i32
    return %arg0, %c0_i32 : i32, i32
  }
}

</mosaic_0001>

<llo_original>
// kernel: energy_trainer_forward.1
$region0: #{energy_trainer_forward.1}
  #allocation0 [shape = 'u32[]', space=smem, size = 0x4, offset = 0x4, fixed_abs, tag = 'smem constant byte address 0x4 - core index']
  #allocation1 [shape = 'u32[144,128]{1,0:T(1,128)}', space=vmem, size = 0x12000, scoped, tag = 'internal scratch']
  #allocation2 [shape = 'f32[16,128]{1,0:T(8,128)}', space=vmem, size = 0x2000, scoped, tag = 'scratch operand']
  %s0 = inlined_call_operand.vmem [shape: bf16[32,1024], index: 0, kind: input, shape index: {}]
  %s1 = inlined_call_operand.vmem [shape: bf16[1024,128], index: 1, kind: input, shape index: {}]
  %s2 = inlined_call_operand.vmem [shape: f32[1,128], index: 2, kind: input, shape index: {}]
  %s3 = inlined_call_operand.vmem [shape: f32[128,128], index: 3, kind: input, shape index: {}]
  %s4 = inlined_call_operand.vmem [shape: f32[1,128], index: 4, kind: input, shape index: {}]
  %s5 = inlined_call_operand.vmem [shape: f32[32,128], index: 5, kind: output, shape index: {}]
  %s6 = sld [smem:[#allocation0]]
  $region61: #{energy_trainer_forward.1} parent=0
    _
  %s8 = ssub.s32 1, %s6
  %s9 = scalar_select 0, %s8, %s6
  loop: start=0, step=1, limit=4
  $region2: #{energy_trainer_forward.1} parent=0 // loop_pre_header
    _
  $region3: #{energy_trainer_forward.1} parent=0 // loop_header
    %s11 = sphi 0, %s15
    %p12 = scmp.ge.s32.totalorder %s11, 4
    %s18 = sphi 0, %s30
    %s19 = sphi 0, %s26
    %s20 = sphi 0, %s18
    %s21 = sphi 0, %s19
    %s22 = sphi 0, %s20
    %s23 = sphi 0, %s21
    %s35 = sphi 0, %s37
    %s38 = sphi 0, %s35
    %s39 = sphi 0, %s38
    %s55 = sphi 0, %s39
    %s61 = sphi 0, %s63
    %s64 = sphi 0, %s61
    %s65 = sphi 0, %s64
    %s81 = sphi 0, %s65
    %s85 = sphi 0, %s85
    %s87 = sphi 0, %s85
    %s88 = sphi 0, %s87
    %s102 = sphi 0, %s88
    %s106 = sphi 0, %s106
    %s108 = sphi 0, %s106
    %s109 = sphi 0, %s108
    %s123 = sphi 0, %s109
    %s127 = sphi 0, %s127
    %s129 = sphi 0, %s127
    %s130 = sphi 0, %s129
    %s144 = sphi 0, %s130
    %s150 = sphi 0, %s152
    %s153 = sphi 0, %s150
    %s154 = sphi 0, %s153
    %s170 = sphi 0, %s154
  $region4: #{energy_trainer_forward.1} parent=0 // loop_header_branch
    %14 = sbr.rel (%p12) target = $region8
  $region5: #{energy_trainer_forward.1} parent=0 // loop_body
    %s16 = ssub.s32 %s11, 1
    %s17 = ssub.s32 %s11, 2
    %s24 = sadd.s32 1, %s19
    %p25 = scmp.ge.s32.totalorder %s24, 1
    %s26 = scalar_select %p25, 0, %s24
    %s27 = sadd.s32 1, %s18
    %s28 = scalar_select %p25, %s27, %s18
    %p29 = scmp.ge.s32.totalorder %s28, 2
    %s30 = scalar_select %p29, 0, %s28
    %s31 = ssub.s32 %s18, %s30
    %s32 = ssub.s32 %s19, %s26
    %s33 = sor.u32 %s31, %s32
    %p34 = scmp.eq.s32.totalorder %s33, 0
    %s36 = sadd.s32 %s35, 1
    %s37 = scalar_select %p34, %s35, %s36
    %p40 = pneg %p34
    %p41 = scmp.eq.s32.totalorder %s11, 1
    %p42 = por %p40, %p41
    %p43 = scmp.ne.s32.totalorder %s35, %s38
    %p44 = scmp.eq.s32.totalorder %s11, 0
    %p45 = por %p43, %p44
    %p46 = scmp.ne.s32.totalorder %s35, %s38
    %p47 = scmp.eq.s32.totalorder %s16, 1
    %p48 = por %p46, %p47
    %p49 = scmp.ne.s32.totalorder %s38, %s39
    %p50 = scmp.eq.s32.totalorder %s16, 0
    %p51 = por %p49, %p50
    %p52 = scmp.ne.s32.totalorder %s38, %s39
    %p53 = scmp.eq.s32.totalorder %s17, 1
    %p54 = por %p52, %p53
    %p56 = scmp.ne.s32.totalorder %s39, %s55
    %p57 = scmp.eq.s32.totalorder %s17, 0
    %p58 = por %p56, %p57
    %s59 = ssub.s32 %s19, %s26
    %p60 = scmp.eq.s32.totalorder %s59, 0
    %s62 = sadd.s32 %s61, 1
    %s63 = scalar_select %p60, %s61, %s62
    %p66 = pneg %p60
    %p67 = scmp.eq.s32.totalorder %s11, 1
    %p68 = por %p66, %p67
    %p69 = scmp.ne.s32.totalorder %s61, %s64
    %p70 = scmp.eq.s32.totalorder %s11, 0
    %p71 = por %p69, %p70
    %p72 = scmp.ne.s32.totalorder %s61, %s64
    %p73 = scmp.eq.s32.totalorder %s16, 1
    %p74 = por %p72, %p73
    %p75 = scmp.ne.s32.totalorder %s64, %s65
    %p76 = scmp.eq.s32.totalorder %s16, 0
    %p77 = por %p75, %p76
    %p78 = scmp.ne.s32.totalorder %s64, %s65
    %p79 = scmp.eq.s32.totalorder %s17, 1
    %p80 = por %p78, %p79
    %p82 = scmp.ne.s32.totalorder %s65, %s81
    %p83 = scmp.eq.s32.totalorder %s17, 0
    %p84 = por %p82, %p83
    %s86 = sadd.s32 %s85, 1
    %p89 = scmp.eq.s32.totalorder %s11, 1
    %p90 = scmp.ne.s32.totalorder %s85, %s87
    %p91 = scmp.eq.s32.totalorder %s11, 0
    %p92 = por %p90, %p91
    %p93 = scmp.ne.s32.totalorder %s85, %s87
    %p94 = scmp.eq.s32.totalorder %s16, 1
    %p95 = por %p93, %p94
    %p96 = scmp.ne.s32.totalorder %s87, %s88
    %p97 = scmp.eq.s32.totalorder %s16, 0
    %p98 = por %p96, %p97
    %p99 = scmp.ne.s32.totalorder %s87, %s88
    %p100 = scmp.eq.s32.totalorder %s17, 1
    %p101 = por %p99, %p100
    %p103 = scmp.ne.s32.totalorder %s88, %s102
    %p104 = scmp.eq.s32.totalorder %s17, 0
    %p105 = por %p103, %p104
    %s107 = sadd.s32 %s106, 1
    %p110 = scmp.eq.s32.totalorder %s11, 1
    %p111 = scmp.ne.s32.totalorder %s106, %s108
    %p112 = scmp.eq.s32.totalorder %s11, 0
    %p113 = por %p111, %p112
    %p114 = scmp.ne.s32.totalorder %s106, %s108
    %p115 = scmp.eq.s32.totalorder %s16, 1
    %p116 = por %p114, %p115
    %p117 = scmp.ne.s32.totalorder %s108, %s109
    %p118 = scmp.eq.s32.totalorder %s16, 0
    %p119 = por %p117, %p118
    %p120 = scmp.ne.s32.totalorder %s108, %s109
    %p121 = scmp.eq.s32.totalorder %s17, 1
    %p122 = por %p120, %p121
    %p124 = scmp.ne.s32.totalorder %s109, %s123
    %p125 = scmp.eq.s32.totalorder %s17, 0
    %p126 = por %p124, %p125
    %s128 = sadd.s32 %s127, 1
    %p131 = scmp.eq.s32.totalorder %s11, 1
    %p132 = scmp.ne.s32.totalorder %s127, %s129
    %p133 = scmp.eq.s32.totalorder %s11, 0
    %p134 = por %p132, %p133
    %p135 = scmp.ne.s32.totalorder %s127, %s129
    %p136 = scmp.eq.s32.totalorder %s16, 1
    %p137 = por %p135, %p136
    %p138 = scmp.ne.s32.totalorder %s129, %s130
    %p139 = scmp.eq.s32.totalorder %s16, 0
    %p140 = por %p138, %p139
    %p141 = scmp.ne.s32.totalorder %s129, %s130
    %p142 = scmp.eq.s32.totalorder %s17, 1
    %p143 = por %p141, %p142
    %p145 = scmp.ne.s32.totalorder %s130, %s144
    %p146 = scmp.eq.s32.totalorder %s17, 0
    %p147 = por %p145, %p146
    %s148 = ssub.s32 %s18, %s30
    %p149 = scmp.eq.s32.totalorder %s148, 0
    %s151 = sadd.s32 %s150, 1
    %s152 = scalar_select %p149, %s150, %s151
    %p155 = pneg %p149
    %p156 = scmp.eq.s32.totalorder %s11, 1
    %p157 = por %p155, %p156
    %p158 = scmp.ne.s32.totalorder %s150, %s153
    %p159 = scmp.eq.s32.totalorder %s11, 0
    %p160 = por %p158, %p159
    %p161 = scmp.ne.s32.totalorder %s150, %s153
    %p162 = scmp.eq.s32.totalorder %s16, 1
    %p163 = por %p161, %p162
    %p164 = scmp.ne.s32.totalorder %s153, %s154
    %p165 = scmp.eq.s32.totalorder %s16, 0
    %p166 = por %p164, %p165
    %p167 = scmp.ne.s32.totalorder %s153, %s154
    %p168 = scmp.eq.s32.totalorder %s17, 1
    %p169 = por %p167, %p168
    %p171 = scmp.ne.s32.totalorder %s154, %s170
    %p172 = scmp.eq.s32.totalorder %s17, 0
    %p173 = por %p171, %p172
    %p174 = scmp.le.s32.totalorder 1, %s11
    %p175 = scmp.lt.s32.totalorder %s11, 3
    %p176 = pnand %p174, %p175
    %p177 = pneg %p176
    // Predicated region
    $region9: #{energy_trainer_forward.1} parent=5 // pred_check
      _
    $region10: #{energy_trainer_forward.1} parent=5 // pred_check_branch
      %179 = sbr.rel (%p176) target = $region12
    $region11: #{energy_trainer_forward.1} parent=5 // pred_region
      %s180 = ssub.s32 %s11, 1
      // Predicated region
      $region13: #{energy_trainer_forward.1} parent=11 // pred_check
        %p181 = pneg %p77
      $region14: #{energy_trainer_forward.1} parent=11 // pred_check_branch
        %183 = sbr.rel (%p181) target = $region16
      $region15: #{energy_trainer_forward.1} parent=11 // pred_region
        %s184 = smul.u32 128, %s21
        %p185 = scmp.lt.s32.totalorder %s184, 127
        %s186 = scalar_select %p185, %s184, 127
        %s187 = smul.addr %s186, 4
        %s188 = scalar_lea.vmem %s1, %s187
        %s189 = smul.u32 128, %s21
      $region16: #{energy_trainer_forward.1} parent=11 // pred_fallthru
        _
      // Predicated region
      $region17: #{energy_trainer_forward.1} parent=11 // pred_check
        %p190 = pneg %p98
      $region18: #{energy_trainer_forward.1} parent=11 // pred_check_branch
        %192 = sbr.rel (%p190) target = $region20
      $region19: #{energy_trainer_forward.1} parent=11 // pred_region
        _
      $region20: #{energy_trainer_forward.1} parent=11 // pred_fallthru
        _
      // Predicated region
      $region21: #{energy_trainer_forward.1} parent=11 // pred_check
        %p193 = pneg %p119
      $region22: #{energy_trainer_forward.1} parent=11 // pred_check_branch
        %195 = sbr.rel (%p193) target = $region24
      $region23: #{energy_trainer_forward.1} parent=11 // pred_region
        _
      $region24: #{energy_trainer_forward.1} parent=11 // pred_fallthru
        _
      // Predicated region
      $region25: #{energy_trainer_forward.1} parent=11 // pred_check
        %p196 = pneg %p140
      $region26: #{energy_trainer_forward.1} parent=11 // pred_check_branch
        %198 = sbr.rel (%p196) target = $region28
      $region27: #{energy_trainer_forward.1} parent=11 // pred_region
        _
      $region28: #{energy_trainer_forward.1} parent=11 // pred_fallthru
        _
    $region12: #{energy_trainer_forward.1} parent=5 // pred_fallthru
      _
    %p199 = scmp.lt.s32.totalorder %s11, 2
    // Predicated region
    $region29: #{energy_trainer_forward.1} parent=5 // pred_check
      %p200 = pneg %p199
    $region30: #{energy_trainer_forward.1} parent=5 // pred_check_branch
      %202 = sbr.rel (%p200) target = $region32
    $region31: #{energy_trainer_forward.1} parent=5 // pred_region
      // Predicated region
      $region33: #{energy_trainer_forward.1} parent=31 // pred_check
        %p203 = pneg %p45
      $region34: #{energy_trainer_forward.1} parent=31 // pred_check_branch
        %205 = sbr.rel (%p203) target = $region36
      $region35: #{energy_trainer_forward.1} parent=31 // pred_region
        %s206 = smul.u32 2, %s18
        %s207 = smul.u32 8, %s19
        %p208 = scmp.lt.s32.totalorder %s206, 3
        %s209 = scalar_select %p208, %s206, 3
        %p210 = scmp.lt.s32.totalorder %s207, 7
        %s211 = scalar_select %p210, %s207, 7
        %s212 = smul.addr %s209, 8
        %s213 = sadd.s32 %s211, %s212
        %s214 = smul.addr %s213, 4
        %s215 = scalar_lea.vmem %s0, %s214
        %s216 = smul.u32 2, %s18
        %s217 = smul.u32 8, %s19
      $region36: #{energy_trainer_forward.1} parent=31 // pred_fallthru
        _
    $region32: #{energy_trainer_forward.1} parent=5 // pred_fallthru
      _
    %p218 = scmp.le.s32.totalorder 1, %s11
    %p219 = scmp.lt.s32.totalorder %s11, 3
    %p220 = pnand %p218, %p219
    %p221 = pneg %p220
    // Predicated region
    $region37: #{energy_trainer_forward.1} parent=5 // pred_check
      _
    $region38: #{energy_trainer_forward.1} parent=5 // pred_check_branch
      %223 = sbr.rel (%p220) target = $region40
    $region39: #{energy_trainer_forward.1} parent=5 // pred_region
      %s224 = ssub.s32 %s11, 1
      %s225 = smul.u32 2, %s20
      %s226 = smul.u32 8, %s21
      %p227 = scmp.lt.s32.totalorder %s225, 3
      %s228 = scalar_select %p227, %s225, 3
      %p229 = scmp.lt.s32.totalorder %s226, 7
      %s230 = scalar_select %p229, %s226, 7
      %s231 = smul.addr %s228, 8
      %s232 = sadd.s32 %s230, %s231
      %s233 = smul.addr %s232, 4
      %s234 = scalar_lea.vmem %s0, %s233
      %p235 = pneg %p51
      %p236 = pneg %p48
      %s237 = smul.u32 128, %s21
      %p238 = scmp.lt.s32.totalorder %s237, 127
      %s239 = scalar_select %p238, %s237, 127
      %s240 = smul.addr %s239, 4
      %s241 = scalar_lea.vmem %s1, %s240
      %p242 = pneg %p77
      %p243 = pneg %p74
      %p244 = pneg %p98
      %p245 = pneg %p95
      %p246 = pneg %p119
      %p247 = pneg %p116
      %p248 = pneg %p140
      %p249 = pneg %p137
      %p250 = pneg %p166
      %p251 = pneg %p163
      %s252 = smul.u32 2, %s20
      %p253 = scmp.lt.s32.totalorder %s252, 3
      %s254 = scalar_select %p253, %s252, 3
      %s255 = smul.addr %s254, 8
      %s256 = scalar_lea.vmem %s5, %s255
      %s257 = smul.u32 2, %s20
      %s258 = smul.u32 8, %s21
      %p259 = scmp.lt.s32.totalorder %s257, 3
      %s260 = scalar_select %p259, %s257, 3
      %p261 = scmp.lt.s32.totalorder %s258, 7
      %s262 = scalar_select %p261, %s258, 7
      %s263 = smul.addr %s260, 8
      %s264 = sadd.s32 %s262, %s263
      %s265 = smul.addr %s264, 4
      %s266 = scalar_lea.vmem %s0, %s265
      %s267 = smul.u32 2, %s20
      %s268 = smul.u32 8, %s21
      %s269 = smul.u32 128, %s21
      %p270 = scmp.lt.s32.totalorder %s269, 127
      %s271 = scalar_select %p270, %s269, 127
      %s272 = smul.addr %s271, 4
      %s273 = scalar_lea.vmem %s1, %s272
      %s274 = smul.u32 128, %s21
      %s275 = smul.u32 2, %s20
      %p276 = scmp.lt.s32.totalorder %s275, 3
      %s277 = scalar_select %p276, %s275, 3
      %s278 = smul.addr %s277, 8
      %s279 = scalar_lea.vmem %s5, %s278
      %s280 = smul.u32 2, %s20
      %p282 = scmp.eq.s32.totalorder %s21, 0
      // Predicated region
      $region41: #{energy_trainer_forward.1} parent=39 // pred_check
        %p283 = pneg %p282
      $region42: #{energy_trainer_forward.1} parent=39 // pred_check_branch
        %285 = sbr.rel (%p283) target = $region44
      $region43: #{energy_trainer_forward.1} parent=39 // pred_region
        %286 = vst [vmem:[#allocation2] sm:$0xff] 0.0
        %287 = vst [vmem:[#allocation2 + $0x8] sm:$0xff] 0.0
      $region44: #{energy_trainer_forward.1} parent=39 // pred_fallthru
        _
      %v288 = vld [vmem:[#allocation2] sm:$0xff]
      %v289 = vld [vmem:[#allocation2 + $0x8] sm:$0xff]
      %v290 = vld [vmem:[%s266] sm:$0xff]
      %v291 = vld [vmem:[%s266 + $0x8] sm:$0xff]
      %v292 = vld [vmem:[%s266 + $0x10] sm:$0xff]
      %v293 = vld [vmem:[%s266 + $0x18] sm:$0xff]
      %v294 = vld [vmem:[%s266 + $0x20] sm:$0xff]
      %v295 = vld [vmem:[%s266 + $0x28] sm:$0xff]
      %v296 = vld [vmem:[%s266 + $0x30] sm:$0xff]
      %v297 = vld [vmem:[%s266 + $0x38] sm:$0xff]
      %v298 = vld [vmem:[%s273] sm:$0xf]
      %v299 = vld [vmem:[%s273 + $0x4] sm:$0xf]
      %v300 = vld [vmem:[%s273 + $0x8] sm:$0xf]
      %v301 = vld [vmem:[%s273 + $0xc] sm:$0xf]
      %v302 = vld [vmem:[%s273 + $0x10] sm:$0xf]
      %v303 = vld [vmem:[%s273 + $0x14] sm:$0xf]
      %v304 = vld [vmem:[%s273 + $0x18] sm:$0xf]
      %v305 = vld [vmem:[%s273 + $0x1c] sm:$0xf]
      %v306 = vld [vmem:[%s273 + $0x20] sm:$0xf]
      %v307 = vld [vmem:[%s273 + $0x24] sm:$0xf]
      %v308 = vld [vmem:[%s273 + $0x28] sm:$0xf]
      %v309 = vld [vmem:[%s273 + $0x2c] sm:$0xf]
      %v310 = vld [vmem:[%s273 + $0x30] sm:$0xf]
      %v311 = vld [vmem:[%s273 + $0x34] sm:$0xf]
      %v312 = vld [vmem:[%s273 + $0x38] sm:$0xf]
      %v313 = vld [vmem:[%s273 + $0x3c] sm:$0xf]
      %v314 = vld [vmem:[%s273 + $0x40] sm:$0xf]
      %v315 = vld [vmem:[%s273 + $0x44] sm:$0xf]
      %v316 = vld [vmem:[%s273 + $0x48] sm:$0xf]
      %v317 = vld [vmem:[%s273 + $0x4c] sm:$0xf]
      %v318 = vld [vmem:[%s273 + $0x50] sm:$0xf]
      %v319 = vld [vmem:[%s273 + $0x54] sm:$0xf]
      %v320 = vld [vmem:[%s273 + $0x58] sm:$0xf]
      %v321 = vld [vmem:[%s273 + $0x5c] sm:$0xf]
      %v322 = vld [vmem:[%s273 + $0x60] sm:$0xf]
      %v323 = vld [vmem:[%s273 + $0x64] sm:$0xf]
      %v324 = vld [vmem:[%s273 + $0x68] sm:$0xf]
      %v325 = vld [vmem:[%s273 + $0x6c] sm:$0xf]
      %v326 = vld [vmem:[%s273 + $0x70] sm:$0xf]
      %v327 = vld [vmem:[%s273 + $0x74] sm:$0xf]
      %v328 = vld [vmem:[%s273 + $0x78] sm:$0xf]
      %v329 = vld [vmem:[%s273 + $0x7c] sm:$0xf]
      %v330 = vld [vmem:[%s273 + $0x80] sm:$0xf]
      %v331 = vld [vmem:[%s273 + $0x84] sm:$0xf]
      %v332 = vld [vmem:[%s273 + $0x88] sm:$0xf]
      %v333 = vld [vmem:[%s273 + $0x8c] sm:$0xf]
      %v334 = vld [vmem:[%s273 + $0x90] sm:$0xf]
      %v335 = vld [vmem:[%s273 + $0x94] sm:$0xf]
      %v336 = vld [vmem:[%s273 + $0x98] sm:$0xf]
      %v337 = vld [vmem:[%s273 + $0x9c] sm:$0xf]
      %v338 = vld [vmem:[%s273 + $0xa0] sm:$0xf]
      %v339 = vld [vmem:[%s273 + $0xa4] sm:$0xf]
      %v340 = vld [vmem:[%s273 + $0xa8] sm:$0xf]
      %v341 = vld [vmem:[%s273 + $0xac] sm:$0xf]
      %v342 = vld [vmem:[%s273 + $0xb0] sm:$0xf]
      %v343 = vld [vmem:[%s273 + $0xb4] sm:$0xf]
      %v344 = vld [vmem:[%s273 + $0xb8] sm:$0xf]
      %v345 = vld [vmem:[%s273 + $0xbc] sm:$0xf]
      %v346 = vld [vmem:[%s273 + $0xc0] sm:$0xf]
      %v347 = vld [vmem:[%s273 + $0xc4] sm:$0xf]
      %v348 = vld [vmem:[%s273 + $0xc8] sm:$0xf]
      %v349 = vld [vmem:[%s273 + $0xcc] sm:$0xf]
      %v350 = vld [vmem:[%s273 + $0xd0] sm:$0xf]
      %v351 = vld [vmem:[%s273 + $0xd4] sm:$0xf]
      %v352 = vld [vmem:[%s273 + $0xd8] sm:$0xf]
      %v353 = vld [vmem:[%s273 + $0xdc] sm:$0xf]
      %v354 = vld [vmem:[%s273 + $0xe0] sm:$0xf]
      %v355 = vld [vmem:[%s273 + $0xe4] sm:$0xf]
      %v356 = vld [vmem:[%s273 + $0xe8] sm:$0xf]
      %v357 = vld [vmem:[%s273 + $0xec] sm:$0xf]
      %v358 = vld [vmem:[%s273 + $0xf0] sm:$0xf]
      %v359 = vld [vmem:[%s273 + $0xf4] sm:$0xf]
      %v360 = vld [vmem:[%s273 + $0xf8] sm:$0xf]
      %v361 = vld [vmem:[%s273 + $0xfc] sm:$0xf]
      %v362 = vld [vmem:[%s273 + $0x100] sm:$0xf]
      %v363 = vld [vmem:[%s273 + $0x104] sm:$0xf]
      %v364 = vld [vmem:[%s273 + $0x108] sm:$0xf]
      %v365 = vld [vmem:[%s273 + $0x10c] sm:$0xf]
      %v366 = vld [vmem:[%s273 + $0x110] sm:$0xf]
      %v367 = vld [vmem:[%s273 + $0x114] sm:$0xf]
      %v368 = vld [vmem:[%s273 + $0x118] sm:$0xf]
      %v369 = vld [vmem:[%s273 + $0x11c] sm:$0xf]
      %v370 = vld [vmem:[%s273 + $0x120] sm:$0xf]
      %v371 = vld [vmem:[%s273 + $0x124] sm:$0xf]
      %v372 = vld [vmem:[%s273 + $0x128] sm:$0xf]
      %v373 = vld [vmem:[%s273 + $0x12c] sm:$0xf]
      %v374 = vld [vmem:[%s273 + $0x130] sm:$0xf]
      %v375 = vld [vmem:[%s273 + $0x134] sm:$0xf]
      %v376 = vld [vmem:[%s273 + $0x138] sm:$0xf]
      %v377 = vld [vmem:[%s273 + $0x13c] sm:$0xf]
      %v378 = vld [vmem:[%s273 + $0x140] sm:$0xf]
      %v379 = vld [vmem:[%s273 + $0x144] sm:$0xf]
      %v380 = vld [vmem:[%s273 + $0x148] sm:$0xf]
      %v381 = vld [vmem:[%s273 + $0x14c] sm:$0xf]
      %v382 = vld [vmem:[%s273 + $0x150] sm:$0xf]
      %v383 = vld [vmem:[%s273 + $0x154] sm:$0xf]
      %v384 = vld [vmem:[%s273 + $0x158] sm:$0xf]
      %v385 = vld [vmem:[%s273 + $0x15c] sm:$0xf]
      %v386 = vld [vmem:[%s273 + $0x160] sm:$0xf]
      %v387 = vld [vmem:[%s273 + $0x164] sm:$0xf]
      %v388 = vld [vmem:[%s273 + $0x168] sm:$0xf]
      %v389 = vld [vmem:[%s273 + $0x16c] sm:$0xf]
      %v390 = vld [vmem:[%s273 + $0x170] sm:$0xf]
      %v391 = vld [vmem:[%s273 + $0x174] sm:$0xf]
      %v392 = vld [vmem:[%s273 + $0x178] sm:$0xf]
      %v393 = vld [vmem:[%s273 + $0x17c] sm:$0xf]
      %v394 = vld [vmem:[%s273 + $0x180] sm:$0xf]
      %v395 = vld [vmem:[%s273 + $0x184] sm:$0xf]
      %v396 = vld [vmem:[%s273 + $0x188] sm:$0xf]
      %v397 = vld [vmem:[%s273 + $0x18c] sm:$0xf]
      %v398 = vld [vmem:[%s273 + $0x190] sm:$0xf]
      %v399 = vld [vmem:[%s273 + $0x194] sm:$0xf]
      %v400 = vld [vmem:[%s273 + $0x198] sm:$0xf]
      %v401 = vld [vmem:[%s273 + $0x19c] sm:$0xf]
      %v402 = vld [vmem:[%s273 + $0x1a0] sm:$0xf]
      %v403 = vld [vmem:[%s273 + $0x1a4] sm:$0xf]
      %v404 = vld [vmem:[%s273 + $0x1a8] sm:$0xf]
      %v405 = vld [vmem:[%s273 + $0x1ac] sm:$0xf]
      %v406 = vld [vmem:[%s273 + $0x1b0] sm:$0xf]
      %v407 = vld [vmem:[%s273 + $0x1b4] sm:$0xf]
      %v408 = vld [vmem:[%s273 + $0x1b8] sm:$0xf]
      %v409 = vld [vmem:[%s273 + $0x1bc] sm:$0xf]
      %v410 = vld [vmem:[%s273 + $0x1c0] sm:$0xf]
      %v411 = vld [vmem:[%s273 + $0x1c4] sm:$0xf]
      %v412 = vld [vmem:[%s273 + $0x1c8] sm:$0xf]
      %v413 = vld [vmem:[%s273 + $0x1cc] sm:$0xf]
      %v414 = vld [vmem:[%s273 + $0x1d0] sm:$0xf]
      %v415 = vld [vmem:[%s273 + $0x1d4] sm:$0xf]
      %v416 = vld [vmem:[%s273 + $0x1d8] sm:$0xf]
      %v417 = vld [vmem:[%s273 + $0x1dc] sm:$0xf]
      %v418 = vld [vmem:[%s273 + $0x1e0] sm:$0xf]
      %v419 = vld [vmem:[%s273 + $0x1e4] sm:$0xf]
      %v420 = vld [vmem:[%s273 + $0x1e8] sm:$0xf]
      %v421 = vld [vmem:[%s273 + $0x1ec] sm:$0xf]
      %v422 = vld [vmem:[%s273 + $0x1f0] sm:$0xf]
      %v423 = vld [vmem:[%s273 + $0x1f4] sm:$0xf]
      %v424 = vld [vmem:[%s273 + $0x1f8] sm:$0xf]
      %v425 = vld [vmem:[%s273 + $0x1fc] sm:$0xf]
      %v434 = vunpack.c.l.b16 %v290
      %v435 = vunpack.c.h.b16 %v290
      %v436 = vunpack.c.l.b16 %v291
      %v437 = vunpack.c.h.b16 %v291
      %v438 = vunpack.c.l.b16 %v292
      %v439 = vunpack.c.h.b16 %v292
      %v440 = vunpack.c.l.b16 %v293
      %v441 = vunpack.c.h.b16 %v293
      %v442 = vunpack.c.l.b16 %v294
      %v443 = vunpack.c.h.b16 %v294
      %v444 = vunpack.c.l.b16 %v295
      %v445 = vunpack.c.h.b16 %v295
      %v446 = vunpack.c.l.b16 %v296
      %v447 = vunpack.c.h.b16 %v296
      %v448 = vunpack.c.l.b16 %v297
      %v449 = vunpack.c.h.b16 %v297
      %v450 = vpack.c.b16 %v442, %v434
      %v451 = vpack.c.b16 %v443, %v435
      %v452 = vpack.c.b16 %v444, %v436
      %v453 = vpack.c.b16 %v445, %v437
      %v454 = vpack.c.b16 %v446, %v438
      %v455 = vpack.c.b16 %v447, %v439
      %v456 = vpack.c.b16 %v448, %v440
      %v457 = vpack.c.b16 %v449, %v441
      %v594 = vunpack.c.l.b16 %v298
      %v595 = vunpack.c.l.b16 %v299
      %v596 = vunpack.c.l.b16 %v300
      %v597 = vunpack.c.l.b16 %v301
      %v598 = vunpack.c.l.b16 %v302
      %v599 = vunpack.c.l.b16 %v303
      %v600 = vunpack.c.l.b16 %v304
      %v601 = vunpack.c.l.b16 %v305
      %v602 = vunpack.c.l.b16 %v306
      %v603 = vunpack.c.l.b16 %v307
      %v604 = vunpack.c.l.b16 %v308
      %v605 = vunpack.c.l.b16 %v309
      %v606 = vunpack.c.l.b16 %v310
      %v607 = vunpack.c.l.b16 %v311
      %v608 = vunpack.c.l.b16 %v312
      %v609 = vunpack.c.l.b16 %v313
      %v610 = vunpack.c.l.b16 %v314
      %v611 = vunpack.c.l.b16 %v315
      %v612 = vunpack.c.l.b16 %v316
      %v613 = vunpack.c.l.b16 %v317
      %v614 = vunpack.c.l.b16 %v318
      %v615 = vunpack.c.l.b16 %v319
      %v616 = vunpack.c.l.b16 %v320
      %v617 = vunpack.c.l.b16 %v321
      %v618 = vunpack.c.l.b16 %v322
      %v619 = vunpack.c.l.b16 %v323
      %v620 = vunpack.c.l.b16 %v324
      %v621 = vunpack.c.l.b16 %v325
      %v622 = vunpack.c.l.b16 %v326
      %v623 = vunpack.c.l.b16 %v327
      %v624 = vunpack.c.l.b16 %v328
      %v625 = vunpack.c.l.b16 %v329
      %v626 = vunpack.c.l.b16 %v330
      %v627 = vunpack.c.l.b16 %v331
      %v628 = vunpack.c.l.b16 %v332
      %v629 = vunpack.c.l.b16 %v333
      %v630 = vunpack.c.l.b16 %v334
      %v631 = vunpack.c.l.b16 %v335
      %v632 = vunpack.c.l.b16 %v336
      %v633 = vunpack.c.l.b16 %v337
      %v634 = vunpack.c.l.b16 %v338
      %v635 = vunpack.c.l.b16 %v339
      %v636 = vunpack.c.l.b16 %v340
      %v637 = vunpack.c.l.b16 %v341
      %v638 = vunpack.c.l.b16 %v342
      %v639 = vunpack.c.l.b16 %v343
      %v640 = vunpack.c.l.b16 %v344
      %v641 = vunpack.c.l.b16 %v345
      %v642 = vunpack.c.l.b16 %v346
      %v643 = vunpack.c.l.b16 %v347
      %v644 = vunpack.c.l.b16 %v348
      %v645 = vunpack.c.l.b16 %v349
      %v646 = vunpack.c.l.b16 %v350
      %v647 = vunpack.c.l.b16 %v351
      %v648 = vunpack.c.l.b16 %v352
      %v649 = vunpack.c.l.b16 %v353
      %v650 = vunpack.c.l.b16 %v354
      %v651 = vunpack.c.l.b16 %v355
      %v652 = vunpack.c.l.b16 %v356
      %v653 = vunpack.c.l.b16 %v357
      %v654 = vunpack.c.l.b16 %v358
      %v655 = vunpack.c.l.b16 %v359
      %v656 = vunpack.c.l.b16 %v360
      %v657 = vunpack.c.l.b16 %v361
      %v658 = vunpack.c.l.b16 %v362
      %v659 = vunpack.c.l.b16 %v363
      %v660 = vunpack.c.l.b16 %v364
      %v661 = vunpack.c.l.b16 %v365
      %v662 = vunpack.c.l.b16 %v366
      %v663 = vunpack.c.l.b16 %v367
      %v664 = vunpack.c.l.b16 %v368
      %v665 = vunpack.c.l.b16 %v369
      %v666 = vunpack.c.l.b16 %v370
      %v667 = vunpack.c.l.b16 %v371
      %v668 = vunpack.c.l.b16 %v372
      %v669 = vunpack.c.l.b16 %v373
      %v670 = vunpack.c.l.b16 %v374
      %v671 = vunpack.c.l.b16 %v375
      %v672 = vunpack.c.l.b16 %v376
      %v673 = vunpack.c.l.b16 %v377
      %v674 = vunpack.c.l.b16 %v378
      %v675 = vunpack.c.l.b16 %v379
      %v676 = vunpack.c.l.b16 %v380
      %v677 = vunpack.c.l.b16 %v381
      %v678 = vunpack.c.l.b16 %v382
      %v679 = vunpack.c.l.b16 %v383
      %v680 = vunpack.c.l.b16 %v384
      %v681 = vunpack.c.l.b16 %v385
      %v682 = vunpack.c.l.b16 %v386
      %v683 = vunpack.c.l.b16 %v387
      %v684 = vunpack.c.l.b16 %v388
      %v685 = vunpack.c.l.b16 %v389
      %v686 = vunpack.c.l.b16 %v390
      %v687 = vunpack.c.l.b16 %v391
      %v688 = vunpack.c.l.b16 %v392
      %v689 = vunpack.c.l.b16 %v393
      %v690 = vunpack.c.l.b16 %v394
      %v691 = vunpack.c.l.b16 %v395
      %v692 = vunpack.c.l.b16 %v396
      %v693 = vunpack.c.l.b16 %v397
      %v694 = vunpack.c.l.b16 %v398
      %v695 = vunpack.c.l.b16 %v399
      %v696 = vunpack.c.l.b16 %v400
      %v697 = vunpack.c.l.b16 %v401
      %v698 = vunpack.c.l.b16 %v402
      %v699 = vunpack.c.l.b16 %v403
      %v700 = vunpack.c.l.b16 %v404
      %v701 = vunpack.c.l.b16 %v405
      %v702 = vunpack.c.l.b16 %v406
      %v703 = vunpack.c.l.b16 %v407
      %v704 = vunpack.c.l.b16 %v408
      %v705 = vunpack.c.l.b16 %v409
      %v706 = vunpack.c.l.b16 %v410
      %v707 = vunpack.c.l.b16 %v411
      %v708 = vunpack.c.l.b16 %v412
      %v709 = vunpack.c.l.b16 %v413
      %v710 = vunpack.c.l.b16 %v414
      %v711 = vunpack.c.l.b16 %v415
      %v712 = vunpack.c.l.b16 %v416
      %v713 = vunpack.c.l.b16 %v417
      %v714 = vunpack.c.l.b16 %v418
      %v715 = vunpack.c.l.b16 %v419
      %v716 = vunpack.c.l.b16 %v420
      %v717 = vunpack.c.l.b16 %v421
      %v718 = vunpack.c.l.b16 %v422
      %v719 = vunpack.c.l.b16 %v423
      %v720 = vunpack.c.l.b16 %v424
      %v721 = vunpack.c.l.b16 %v425
      %v722 = vpack.c.b16 %v595, %v594
      %v723 = vpack.c.b16 %v597, %v596
      %v724 = vpack.c.b16 %v599, %v598
      %v725 = vpack.c.b16 %v601, %v600
      %v726 = vpack.c.b16 %v603, %v602
      %v727 = vpack.c.b16 %v605, %v604
      %v728 = vpack.c.b16 %v607, %v606
      %v729 = vpack.c.b16 %v609, %v608
      %v730 = vpack.c.b16 %v611, %v610
      %v731 = vpack.c.b16 %v613, %v612
      %v732 = vpack.c.b16 %v615, %v614
      %v733 = vpack.c.b16 %v617, %v616
      %v734 = vpack.c.b16 %v619, %v618
      %v735 = vpack.c.b16 %v621, %v620
      %v736 = vpack.c.b16 %v623, %v622
      %v737 = vpack.c.b16 %v625, %v624
      %v738 = vpack.c.b16 %v627, %v626
      %v739 = vpack.c.b16 %v629, %v628
      %v740 = vpack.c.b16 %v631, %v630
      %v741 = vpack.c.b16 %v633, %v632
      %v742 = vpack.c.b16 %v635, %v634
      %v743 = vpack.c.b16 %v637, %v636
      %v744 = vpack.c.b16 %v639, %v638
      %v745 = vpack.c.b16 %v641, %v640
      %v746 = vpack.c.b16 %v643, %v642
      %v747 = vpack.c.b16 %v645, %v644
      %v748 = vpack.c.b16 %v647, %v646
      %v749 = vpack.c.b16 %v649, %v648
      %v750 = vpack.c.b16 %v651, %v650
      %v751 = vpack.c.b16 %v653, %v652
      %v752 = vpack.c.b16 %v655, %v654
      %v753 = vpack.c.b16 %v657, %v656
      %v754 = vpack.c.b16 %v659, %v658
      %v755 = vpack.c.b16 %v661, %v660
      %v756 = vpack.c.b16 %v663, %v662
      %v757 = vpack.c.b16 %v665, %v664
      %v758 = vpack.c.b16 %v667, %v666
      %v759 = vpack.c.b16 %v669, %v668
      %v760 = vpack.c.b16 %v671, %v670
      %v761 = vpack.c.b16 %v673, %v672
      %v762 = vpack.c.b16 %v675, %v674
      %v763 = vpack.c.b16 %v677, %v676
      %v764 = vpack.c.b16 %v679, %v678
      %v765 = vpack.c.b16 %v681, %v680
      %v766 = vpack.c.b16 %v683, %v682
      %v767 = vpack.c.b16 %v685, %v684
      %v768 = vpack.c.b16 %v687, %v686
      %v769 = vpack.c.b16 %v689, %v688
      %v770 = vpack.c.b16 %v691, %v690
      %v771 = vpack.c.b16 %v693, %v692
      %v772 = vpack.c.b16 %v695, %v694
      %v773 = vpack.c.b16 %v697, %v696
      %v774 = vpack.c.b16 %v699, %v698
      %v775 = vpack.c.b16 %v701, %v700
      %v776 = vpack.c.b16 %v703, %v702
      %v777 = vpack.c.b16 %v705, %v704
      %v778 = vpack.c.b16 %v707, %v706
      %v779 = vpack.c.b16 %v709, %v708
      %v780 = vpack.c.b16 %v711, %v710
      %v781 = vpack.c.b16 %v713, %v712
      %v782 = vpack.c.b16 %v715, %v714
      %v783 = vpack.c.b16 %v717, %v716
      %v784 = vpack.c.b16 %v719, %v718
      %v785 = vpack.c.b16 %v721, %v720
      %850 = vmatprep.subr.bf16.mxu0 0
      %851 = vmatpush1.bf16.msra.mxu0 %v729
      %852 = vmatprep.subr.bf16.mxu0 0
      %853 = vmatpush1.bf16.msra.mxu0 %v728
      %854 = vmatprep.subr.bf16.mxu0 0
      %855 = vmatpush1.bf16.msra.mxu0 %v727
      %856 = vmatprep.subr.bf16.mxu0 0
      %857 = vmatpush1.bf16.msra.mxu0 %v726
      %858 = vmatprep.subr.bf16.mxu0 0
      %859 = vmatpush1.bf16.msra.mxu0 %v725
      %860 = vmatprep.subr.bf16.mxu0 0
      %861 = vmatpush1.bf16.msra.mxu0 %v724
      %862 = vmatprep.subr.bf16.mxu0 0
      %863 = vmatpush1.bf16.msra.mxu0 %v723
      %864 = vmatprep.subr.bf16.mxu0 0
      %865 = vmatpush1.bf16.msra.mxu0 %v722
      %866 = vmatprep.subr.bf16.mxu0 0
      %867 = vmatpush2.bf16.msra.mxu0 %v737
      %868 = vmatprep.subr.bf16.mxu0 0
      %869 = vmatpush2.bf16.msra.mxu0 %v736
      %870 = vmatprep.subr.bf16.mxu0 0
      %871 = vmatpush2.bf16.msra.mxu0 %v735
      %872 = vmatprep.subr.bf16.mxu0 0
      %873 = vmatpush2.bf16.msra.mxu0 %v734
      %874 = vmatprep.subr.bf16.mxu0 0
      %875 = vmatpush2.bf16.msra.mxu0 %v733
      %876 = vmatprep.subr.bf16.mxu0 0
      %877 = vmatpush2.bf16.msra.mxu0 %v732
      %878 = vmatprep.subr.bf16.mxu0 0
      %879 = vmatpush2.bf16.msra.mxu0 %v731
      %880 = vmatprep.subr.bf16.mxu0 0
      %881 = vmatpush2.bf16.msra.mxu0 %v730
      %882 = vmatprep.mubr.bf16.mxu0 %v451
      %883 = vmatmul.mubr.bf16.gmra.mxu0 %v450
      %v884 = vpop.f32.mrf.mxu0
      %v885 = vadd.f32 0.0, %v884
      %v886 = vpop.f32.mrf.mxu0
      %v887 = vpop.f32.mrf.mxu0
      %v888 = vadd.f32 0.0, %v887
      %v889 = vpop.f32.mrf.mxu0
      %890 = vdwg.mxu0
      %891 = vmatprep.subr.bf16.mxu0 0
      %892 = vmatpush1.bf16.msra.mxu0 %v745
      %893 = vmatprep.subr.bf16.mxu0 0
      %894 = vmatpush1.bf16.msra.mxu0 %v744
      %895 = vmatprep.subr.bf16.mxu0 0
      %896 = vmatpush1.bf16.msra.mxu0 %v743
      %897 = vmatprep.subr.bf16.mxu0 0
      %898 = vmatpush1.bf16.msra.mxu0 %v742
      %899 = vmatprep.subr.bf16.mxu0 0
      %900 = vmatpush1.bf16.msra.mxu0 %v741
      %901 = vmatprep.subr.bf16.mxu0 0
      %902 = vmatpush1.bf16.msra.mxu0 %v740
      %903 = vmatprep.subr.bf16.mxu0 0
      %904 = vmatpush1.bf16.msra.mxu0 %v739
      %905 = vmatprep.subr.bf16.mxu0 0
      %906 = vmatpush1.bf16.msra.mxu0 %v738
      %907 = vmatprep.subr.bf16.mxu0 0
      %908 = vmatpush2.bf16.msra.mxu0 %v753
      %909 = vmatprep.subr.bf16.mxu0 0
      %910 = vmatpush2.bf16.msra.mxu0 %v752
      %911 = vmatprep.subr.bf16.mxu0 0
      %912 = vmatpush2.bf16.msra.mxu0 %v751
      %913 = vmatprep.subr.bf16.mxu0 0
      %914 = vmatpush2.bf16.msra.mxu0 %v750
      %915 = vmatprep.subr.bf16.mxu0 0
      %916 = vmatpush2.bf16.msra.mxu0 %v749
      %917 = vmatprep.subr.bf16.mxu0 0
      %918 = vmatpush2.bf16.msra.mxu0 %v748
      %919 = vmatprep.subr.bf16.mxu0 0
      %920 = vmatpush2.bf16.msra.mxu0 %v747
      %921 = vmatprep.subr.bf16.mxu0 0
      %922 = vmatpush2.bf16.msra.mxu0 %v746
      %923 = vmatprep.mubr.bf16.mxu0 %v453
      %924 = vmatmul.mubr.bf16.gmra.mxu0 %v452
      %v925 = vpop.f32.mrf.mxu0
      %v926 = vadd.f32 %v885, %v925
      %v927 = vpop.f32.mrf.mxu0
      %v928 = vpop.f32.mrf.mxu0
      %v929 = vadd.f32 %v888, %v928
      %v930 = vpop.f32.mrf.mxu0
      %931 = vdwg.mxu0
      %932 = vmatprep.subr.bf16.mxu0 0
      %933 = vmatpush1.bf16.msra.mxu0 %v761
      %934 = vmatprep.subr.bf16.mxu0 0
      %935 = vmatpush1.bf16.msra.mxu0 %v760
      %936 = vmatprep.subr.bf16.mxu0 0
      %937 = vmatpush1.bf16.msra.mxu0 %v759
      %938 = vmatprep.subr.bf16.mxu0 0
      %939 = vmatpush1.bf16.msra.mxu0 %v758
      %940 = vmatprep.subr.bf16.mxu0 0
      %941 = vmatpush1.bf16.msra.mxu0 %v757
      %942 = vmatprep.subr.bf16.mxu0 0
      %943 = vmatpush1.bf16.msra.mxu0 %v756
      %944 = vmatprep.subr.bf16.mxu0 0
      %945 = vmatpush1.bf16.msra.mxu0 %v755
      %946 = vmatprep.subr.bf16.mxu0 0
      %947 = vmatpush1.bf16.msra.mxu0 %v754
      %948 = vmatprep.subr.bf16.mxu0 0
      %949 = vmatpush2.bf16.msra.mxu0 %v769
      %950 = vmatprep.subr.bf16.mxu0 0
      %951 = vmatpush2.bf16.msra.mxu0 %v768
      %952 = vmatprep.subr.bf16.mxu0 0
      %953 = vmatpush2.bf16.msra.mxu0 %v767
      %954 = vmatprep.subr.bf16.mxu0 0
      %955 = vmatpush2.bf16.msra.mxu0 %v766
      %956 = vmatprep.subr.bf16.mxu0 0
      %957 = vmatpush2.bf16.msra.mxu0 %v765
      %958 = vmatprep.subr.bf16.mxu0 0
      %959 = vmatpush2.bf16.msra.mxu0 %v764
      %960 = vmatprep.subr.bf16.mxu0 0
      %961 = vmatpush2.bf16.msra.mxu0 %v763
      %962 = vmatprep.subr.bf16.mxu0 0
      %963 = vmatpush2.bf16.msra.mxu0 %v762
      %964 = vmatprep.mubr.bf16.mxu0 %v455
      %965 = vmatmul.mubr.bf16.gmra.mxu0 %v454
      %v966 = vpop.f32.mrf.mxu0
      %v967 = vadd.f32 %v926, %v966
      %v968 = vpop.f32.mrf.mxu0
      %v969 = vpop.f32.mrf.mxu0
      %v970 = vadd.f32 %v929, %v969
      %v971 = vpop.f32.mrf.mxu0
      %972 = vdwg.mxu0
      %973 = vmatprep.subr.bf16.mxu0 0
      %974 = vmatpush1.bf16.msra.mxu0 %v777
      %975 = vmatprep.subr.bf16.mxu0 0
      %976 = vmatpush1.bf16.msra.mxu0 %v776
      %977 = vmatprep.subr.bf16.mxu0 0
      %978 = vmatpush1.bf16.msra.mxu0 %v775
      %979 = vmatprep.subr.bf16.mxu0 0
      %980 = vmatpush1.bf16.msra.mxu0 %v774
      %981 = vmatprep.subr.bf16.mxu0 0
      %982 = vmatpush1.bf16.msra.mxu0 %v773
      %983 = vmatprep.subr.bf16.mxu0 0
      %984 = vmatpush1.bf16.msra.mxu0 %v772
      %985 = vmatprep.subr.bf16.mxu0 0
      %986 = vmatpush1.bf16.msra.mxu0 %v771
      %987 = vmatprep.subr.bf16.mxu0 0
      %988 = vmatpush1.bf16.msra.mxu0 %v770
      %989 = vmatprep.subr.bf16.mxu0 0
      %990 = vmatpush2.bf16.msra.mxu0 %v785
      %991 = vmatprep.subr.bf16.mxu0 0
      %992 = vmatpush2.bf16.msra.mxu0 %v784
      %993 = vmatprep.subr.bf16.mxu0 0
      %994 = vmatpush2.bf16.msra.mxu0 %v783
      %995 = vmatprep.subr.bf16.mxu0 0
      %996 = vmatpush2.bf16.msra.mxu0 %v782
      %997 = vmatprep.subr.bf16.mxu0 0
      %998 = vmatpush2.bf16.msra.mxu0 %v781
      %999 = vmatprep.subr.bf16.mxu0 0
      %1000 = vmatpush2.bf16.msra.mxu0 %v780
      %1001 = vmatprep.subr.bf16.mxu0 0
      %1002 = vmatpush2.bf16.msra.mxu0 %v779
      %1003 = vmatprep.subr.bf16.mxu0 0
      %1004 = vmatpush2.bf16.msra.mxu0 %v778
      %1005 = vmatprep.mubr.bf16.mxu0 %v457
      %1006 = vmatmul.mubr.bf16.gmra.mxu0 %v456
      %v1007 = vpop.f32.mrf.mxu0
      %v1008 = vadd.f32 %v967, %v1007
      %v1009 = vpop.f32.mrf.mxu0
      %v1010 = vpop.f32.mrf.mxu0
      %v1011 = vadd.f32 %v970, %v1010
      %v1012 = vpop.f32.mrf.mxu0
      %1013 = vdwg.mxu0
      %v1014 = vadd.f32 %v288, %v1008
      %v1015 = vadd.f32 %v289, %v1011
      %1016 = vst [vmem:[#allocation2] sm:$0xff] %v1014
      %1017 = vst [vmem:[#allocation2 + $0x8] sm:$0xff] %v1015
      // Predicated region
      $region45: #{energy_trainer_forward.1} parent=39 // pred_check
        %p1018 = pneg %p282
      $region46: #{energy_trainer_forward.1} parent=39 // pred_check_branch
        %1020 = sbr.rel (%p1018) target = $region48
      $region47: #{energy_trainer_forward.1} parent=39 // pred_region
        %v1021 = vld [vmem:[#allocation2] sm:$0xff]
        %v1022 = vld [vmem:[#allocation2 + $0x8] sm:$0xff]
        %v1023 = vld [vmem:[%s2] sm:$0x1]
        %v1025 = vlaneseq
        %v1026 = vshrl.u32 %v1025, 7
        %v1027 = vsub.s32 0, %v1026
        %v1028 = vrot.slane %v1023, %v1027
        %v1030 = vadd.f32 %v1021, %v1028
        %v1031 = vadd.f32 %v1022, %v1028
        %v1032 = vmax.f32 %v1030, 0.0
        %v1033 = vmax.f32 %v1031, 0.0
        %v1034 = vld [vmem:[%s3] sm:$0xff]
        %v1035 = vld [vmem:[%s3 + $0x8] sm:$0xff]
        %v1036 = vld [vmem:[%s3 + $0x10] sm:$0xff]
        %v1037 = vld [vmem:[%s3 + $0x18] sm:$0xff]
        %v1038 = vld [vmem:[%s3 + $0x20] sm:$0xff]
        %v1039 = vld [vmem:[%s3 + $0x28] sm:$0xff]
        %v1040 = vld [vmem:[%s3 + $0x30] sm:$0xff]
        %v1041 = vld [vmem:[%s3 + $0x38] sm:$0xff]
        %v1042 = vld [vmem:[%s3 + $0x40] sm:$0xff]
        %v1043 = vld [vmem:[%s3 + $0x48] sm:$0xff]
        %v1044 = vld [vmem:[%s3 + $0x50] sm:$0xff]
        %v1045 = vld [vmem:[%s3 + $0x58] sm:$0xff]
        %v1046 = vld [vmem:[%s3 + $0x60] sm:$0xff]
        %v1047 = vld [vmem:[%s3 + $0x68] sm:$0xff]
        %v1048 = vld [vmem:[%s3 + $0x70] sm:$0xff]
        %v1049 = vld [vmem:[%s3 + $0x78] sm:$0xff]
        %v1050 = vld [vmem:[%s4] sm:$0x1]
        %v1052 = vlaneseq
        %v1053 = vshrl.u32 %v1052, 7
        %v1054 = vsub.s32 0, %v1053
        %v1055 = vrot.slane %v1050, %v1054
        %1057 = vmatprep.subr.mxu0 0.0
        %1058 = vmatpush1.msra.mxu0 %v1049
        %1059 = vmatprep.subr.mxu0 0.0
        %1060 = vmatpush1.msra.mxu0 %v1048
        %1061 = vmatprep.subr.mxu0 0.0
        %1062 = vmatpush1.msra.mxu0 %v1047
        %1063 = vmatprep.subr.mxu0 0.0
        %1064 = vmatpush1.msra.mxu0 %v1046
        %1065 = vmatprep.subr.mxu0 0.0
        %1066 = vmatpush1.msra.mxu0 %v1045
        %1067 = vmatprep.subr.mxu0 0.0
        %1068 = vmatpush1.msra.mxu0 %v1044
        %1069 = vmatprep.subr.mxu0 0.0
        %1070 = vmatpush1.msra.mxu0 %v1043
        %1071 = vmatprep.subr.mxu0 0.0
        %1072 = vmatpush1.msra.mxu0 %v1042
        %1073 = vmatprep.subr.mxu0 0.0
        %1074 = vmatpush1.msra.mxu0 %v1041
        %1075 = vmatprep.subr.mxu0 0.0
        %1076 = vmatpush1.msra.mxu0 %v1040
        %1077 = vmatprep.subr.mxu0 0.0
        %1078 = vmatpush1.msra.mxu0 %v1039
        %1079 = vmatprep.subr.mxu0 0.0
        %1080 = vmatpush1.msra.mxu0 %v1038
        %1081 = vmatprep.subr.mxu0 0.0
        %1082 = vmatpush1.msra.mxu0 %v1037
        %1083 = vmatprep.subr.mxu0 0.0
        %1084 = vmatpush1.msra.mxu0 %v1036
        %1085 = vmatprep.subr.mxu0 0.0
        %1086 = vmatpush1.msra.mxu0 %v1035
        %1087 = vmatprep.subr.mxu0 0.0
        %1088 = vmatpush1.msra.mxu0 %v1034
        %1089 = vmatprep.subr.mxu0 0.0
        %1090 = vmatpush2.msra.mxu0 0.0
        %1091 = vmatprep.subr.mxu0 0.0
        %1092 = vmatpush2.msra.mxu0 0.0
        %1093 = vmatprep.subr.mxu0 0.0
        %1094 = vmatpush2.msra.mxu0 0.0
        %1095 = vmatprep.subr.mxu0 0.0
        %1096 = vmatpush2.msra.mxu0 0.0
        %1097 = vmatprep.subr.mxu0 0.0
        %1098 = vmatpush2.msra.mxu0 0.0
        %1099 = vmatprep.subr.mxu0 0.0
        %1100 = vmatpush2.msra.mxu0 0.0
        %1101 = vmatprep.subr.mxu0 0.0
        %1102 = vmatpush2.msra.mxu0 0.0
        %1103 = vmatprep.subr.mxu0 0.0
        %1104 = vmatpush2.msra.mxu0 0.0
        %1105 = vmatprep.subr.mxu0 0.0
        %1106 = vmatpush2.msra.mxu0 0.0
        %1107 = vmatprep.subr.mxu0 0.0
        %1108 = vmatpush2.msra.mxu0 0.0
        %1109 = vmatprep.subr.mxu0 0.0
        %1110 = vmatpush2.msra.mxu0 0.0
        %1111 = vmatprep.subr.mxu0 0.0
        %1112 = vmatpush2.msra.mxu0 0.0
        %1113 = vmatprep.subr.mxu0 0.0
        %1114 = vmatpush2.msra.mxu0 0.0
        %1115 = vmatprep.subr.mxu0 0.0
        %1116 = vmatpush2.msra.mxu0 0.0
        %1117 = vmatprep.subr.mxu0 0.0
        %1118 = vmatpush2.msra.mxu0 0.0
        %1119 = vmatprep.subr.mxu0 0.0
        %1120 = vmatpush2.msra.mxu0 0.0
        %1121 = vmatprep.mubr.f32.mxu0 0.0
        %1122 = vmatmul.mubr.f32.gmra.mxu0 %v1032
        %v1123 = vpop.f32.mrf.mxu0
        %v1124 = vadd.f32 %v1055, %v1123
        %v1125 = vpop.f32.mrf.mxu0
        %1126 = vmatprep.mubr.f32.mxu0 0.0
        %1127 = vmatmul.mubr.f32.gmra.mxu0 %v1033
        %v1128 = vpop.f32.mrf.mxu0
        %v1129 = vadd.f32 %v1055, %v1128
        %v1130 = vpop.f32.mrf.mxu0
        %1131 = vdwg.mxu0
        %1132 = vst [vmem:[%s279] sm:$0xff] %v1124
        %1133 = vst [vmem:[%s279 + $0x8] sm:$0xff] %v1129
      $region48: #{energy_trainer_forward.1} parent=39 // pred_fallthru
        _
      %s1134 = smul.u32 2, %s20
      %p1135 = scmp.lt.s32.totalorder %s1134, 3
      %s1136 = scalar_select %p1135, %s1134, 3
      %s1137 = smul.addr %s1136, 8
      %s1138 = scalar_lea.vmem %s5, %s1137
      // Predicated region
      $region49: #{energy_trainer_forward.1} parent=39 // pred_check
        %p1139 = pneg %p163
      $region50: #{energy_trainer_forward.1} parent=39 // pred_check_branch
        %1141 = sbr.rel (%p1139) target = $region52
      $region51: #{energy_trainer_forward.1} parent=39 // pred_region
        %s1142 = smul.u32 2, %s20
      $region52: #{energy_trainer_forward.1} parent=39 // pred_fallthru
        _
    $region40: #{energy_trainer_forward.1} parent=5 // pred_fallthru
      _
    %p1143 = scmp.le.s32.totalorder 2, %s11
    // Predicated region
    $region53: #{energy_trainer_forward.1} parent=5 // pred_check
      %p1144 = pneg %p1143
    $region54: #{energy_trainer_forward.1} parent=5 // pred_check_branch
      %1146 = sbr.rel (%p1144) target = $region56
    $region55: #{energy_trainer_forward.1} parent=5 // pred_region
      %s1147 = ssub.s32 %s11, 2
      // Predicated region
      $region57: #{energy_trainer_forward.1} parent=55 // pred_check
        %p1148 = pneg %p169
      $region58: #{energy_trainer_forward.1} parent=55 // pred_check_branch
        %1150 = sbr.rel (%p1148) target = $region60
      $region59: #{energy_trainer_forward.1} parent=55 // pred_region
        %s1151 = smul.u32 2, %s22
        %p1152 = scmp.lt.s32.totalorder %s1151, 3
        %s1153 = scalar_select %p1152, %s1151, 3
        %s1154 = smul.addr %s1153, 8
        %s1155 = scalar_lea.vmem %s5, %s1154
      $region60: #{energy_trainer_forward.1} parent=55 // pred_fallthru
        _
    $region56: #{energy_trainer_forward.1} parent=5 // pred_fallthru
      _
  $region6: #{energy_trainer_forward.1} parent=0 // loop_footer
    %s15 = sadd.s32 1, %s11
  $region7: #{energy_trainer_forward.1} parent=0 // loop_footer_branch
    %10 = sbr.rel target = $region3
  $region8: #{energy_trainer_forward.1} parent=0 // loop_exit
    _

</llo_original>
